<compile_context>
chip_gen: v7x
topology: tpu7x:2x2x1
jax: 0.10.0
libtpu: 0.0.40
codegen_flags: <defaults>
</compile_context>

<pallas_src>
import functools

import jax
import jax.numpy as jnp
from jax import lax
from jax.experimental import pallas as pl
from jax.experimental.pallas import tpu as pltpu

# ---------------- model dims (from the PyTorch __init__) ----------------
D_X = 199          # x / recon features
D_Y = 20           # condition features (219 - 199 == 24 - 4)
D_H1 = 128         # fc1 / fc5 width
D_H2 = 64          # fc2 / fc4 width
D_Z = 4            # latent width (fc31 / fc32)

# lane-padded widths used by the kernel
D_IN_PAD = 256     # cat(x, y): 219 -> 256  (fc1 K dim)
D_LAT_PAD = 128    # fused [mu | logvar | 0...] slab (fc31/fc32 N dim)
D_DEC_PAD = 128    # decoder slab [mu | eps*std | y | 0...] (fc4 K dim)
D_OUT_PAD = 256    # recon: 199 -> 256 (fc6 N dim)

# lane offsets inside the 128-wide slabs
_MU_LO, _MU_HI = 0, D_Z                   # mu lanes
_LV_LO, _LV_HI = D_Z, 2 * D_Z             # logvar lanes (also eps / eps*std lanes)
_Y_LO, _Y_HI = 2 * D_Z, 2 * D_Z + D_Y     # y lanes in the decoder slab


def _cvae_kernel(xy_ref, slab_ref,
                 w1_ref, b1_ref,
                 w2_ref, b2_ref,
                 w3_ref, b3_ref,
                 w4_ref, b4_ref,
                 w5_ref, b5_ref,
                 w6_ref, b6_ref,
                 recon_ref, ml_ref):
    f32 = jnp.float32
    bf16 = jnp.bfloat16

    # ---------------- encoder ----------------
    # fc1: one K=256 matmul on the pre-concatenated, lane-padded [x|y|0] bf16 input.
    h1 = jnp.dot(xy_ref[...], w1_ref[...], preferred_element_type=f32)
    h1 = jnp.maximum(h1 + b1_ref[...], 0.0)

    h2 = jnp.dot(h1.astype(bf16), w2_ref[...], preferred_element_type=f32)
    h2 = jnp.maximum(h2 + b2_ref[...], 0.0)

    # fc31 / fc32 fused: lanes 0:4 = mu, lanes 4:8 = logvar, lanes >= 8 EXACTLY zero
    # (zero-padded w3 columns / b3).  Lane-dense 128-wide store; wrapper slices mu/logvar.
    ml = jnp.dot(h2.astype(bf16), w3_ref[...], preferred_element_type=f32) + b3_ref[...]
    ml_ref[...] = ml

    # -------- reparameterize + decoder-input assembly (VPU/EUP only, no slices) --------
    # slab carries eps in lanes 4:8 and y in lanes 8:28 (zeros elsewhere).  Because ml == 0
    # on lanes >= 8, exp(0.5*ml) == 1 there, hence
    #   s = slab * exp(0.5*ml) == [0 | eps*std | y | 0...]
    s = slab_ref[...].astype(f32) * jnp.exp(0.5 * ml)
    lane = lax.broadcasted_iota(jnp.int32, ml.shape, 1)
    mu_only = jnp.where(lane < _MU_HI, ml, 0.0)          # mu in lanes 0:4, zero elsewhere
    # w4 is padded so rows 0:4 and 4:8 both hold w4[:4] and rows 8:28 hold w4[4:]; since
    # z = mu + eps*std this makes  a @ w4_pad == cat(z, y) @ w4  in ONE K=128 matmul.
    a = mu_only + s

    # ---------------- decoder ----------------
    h4 = jnp.dot(a.astype(bf16), w4_ref[...], preferred_element_type=f32)
    h4 = jnp.maximum(h4 + b4_ref[...], 0.0)

    h5 = jnp.dot(h4.astype(bf16), w5_ref[...], preferred_element_type=f32)
    h5 = jnp.maximum(h5 + b5_ref[...], 0.0)

    recon_ref[...] = (jnp.dot(h5.astype(bf16), w6_ref[...],
                              preferred_element_type=f32)
                      + b6_ref[...]).astype(recon_ref.dtype)


def _round_up(n, m):
    return (n + m - 1) // m * m


def init_params(key):
    """Deterministic synthetic parameters. Weights stored as [in, out], biases as [1, out]."""
    dims = {
        "w1": (D_X + D_Y, D_H1), "b1": (1, D_H1),
        "w2": (D_H1, D_H2),      "b2": (1, D_H2),
        "w31": (D_H2, D_Z),      "b31": (1, D_Z),
        "w32": (D_H2, D_Z),      "b32": (1, D_Z),
        "w4": (D_Z + D_Y, D_H2), "b4": (1, D_H2),
        "w5": (D_H2, D_H1),      "b5": (1, D_H1),
        "w6": (D_H1, D_X),       "b6": (1, D_X),
    }
    params = {}
    keys = jax.random.split(key, len(dims))
    for k, (name, shape) in zip(keys, sorted(dims.items())):
        fan_in = shape[0] if name.startswith("w") else shape[1]
        bound = 1.0 / jnp.sqrt(jnp.float32(fan_in))
        params[name] = jax.random.uniform(
            k, shape, dtype=jnp.float32, minval=-bound, maxval=bound)
    return params


@functools.partial(jax.jit, static_argnames=("block_b",))
def cvae_forward(x, y, eps, params, *, block_b=1024):
    f32 = jnp.float32
    bf16 = jnp.bfloat16
    B = x.shape[0]

    # batch tile: multiple of 16 (bf16 sublane packing), capped by block_b; for medium/large
    # batches cap so the grid has >= 2 steps (v7x has 2 TensorCores on the "parallel" axis).
    TB = min(_round_up(block_b, 16), _round_up(B, 16))
    if B >= 512:
        TB = min(TB, _round_up(-(-B // 2), 16))
    B_pad = _round_up(B, TB)
    grid = (B_pad // TB,)

    # ---- activations, lane-padded + bf16, built with single fused concat+pad each ----
    # encoder input [x | y | 0...]  (K = 256)
    xy = jnp.pad(jnp.concatenate([x, y], axis=1),
                 ((0, B_pad - B), (0, D_IN_PAD - (D_X + D_Y)))).astype(bf16)
    # merged decoder slab [0(4) | eps(4) | y(20) | 0...]  (K = 128)
    slab = jnp.pad(jnp.concatenate([eps, y], axis=1),
                   ((0, B_pad - B), (D_Z, D_DEC_PAD - (2 * D_Z + D_Y)))).astype(bf16)

    # ---- weights: cast to bf16 once, pad to lane-aligned shapes ----
    w1 = jnp.zeros((D_IN_PAD, D_H1), f32).at[:D_X + D_Y].set(params["w1"]).astype(bf16)
    w2 = params["w2"].astype(bf16)
    # INVARIANT: columns >= 8 of w3 and lanes >= 8 of b3 must stay exactly zero
    # (the kernel's eps/y slab trick and the w4 row duplication both depend on it).
    w3 = (jnp.zeros((D_H2, D_LAT_PAD), f32)
          .at[:, _MU_LO:_MU_HI].set(params["w31"])
          .at[:, _LV_LO:_LV_HI].set(params["w32"])).astype(bf16)
    b3 = (jnp.zeros((1, D_LAT_PAD), f32)
          .at[:, _MU_LO:_MU_HI].set(params["b31"])
          .at[:, _LV_LO:_LV_HI].set(params["b32"]))
    w4 = (jnp.zeros((D_DEC_PAD, D_H2), f32)
          .at[_MU_LO:_MU_HI].set(params["w4"][:D_Z])      # rows hit by mu
          .at[_LV_LO:_LV_HI].set(params["w4"][:D_Z])      # rows hit by eps*std (same weights)
          .at[_Y_LO:_Y_HI].set(params["w4"][D_Z:])).astype(bf16)
    w5 = params["w5"].astype(bf16)
    w6 = jnp.zeros((D_H1, D_OUT_PAD), f32).at[:, :D_X].set(params["w6"]).astype(bf16)
    b6 = jnp.zeros((1, D_OUT_PAD), f32).at[:, :D_X].set(params["b6"])

    ins = (xy, slab,
           w1, params["b1"],
           w2, params["b2"],
           w3, b3,
           w4, params["b4"],
           w5, params["b5"],
           w6, b6)

    def batch_spec(width):
        return pl.BlockSpec((TB, width), lambda i: (i, 0))

    def resident_spec(a):                    # same block every step -> stays in VMEM
        return pl.BlockSpec(a.shape, lambda i: (0, 0))

    in_specs = [batch_spec(D_IN_PAD), batch_spec(D_DEC_PAD)]
    in_specs += [resident_spec(a) for a in ins[2:]]

    out_shape = (jax.ShapeDtypeStruct((B_pad, D_OUT_PAD), bf16),  # recon (lane-padded, bf16)
                 jax.ShapeDtypeStruct((B_pad, D_LAT_PAD), f32))   # [mu | logvar | 0...]
    out_specs = (batch_spec(D_OUT_PAD), batch_spec(D_LAT_PAD))

    flops = 2 * B_pad * (D_IN_PAD * D_H1 + D_H1 * D_H2 + D_H2 * D_LAT_PAD
                         + D_DEC_PAD * D_H2 + D_H2 * D_H1 + D_H1 * D_OUT_PAD)
    nbytes = lambda a: a.size * a.dtype.itemsize
    bytes_accessed = int(sum(nbytes(a) for a in ins)
                         + B_pad * (D_OUT_PAD * 2 + D_LAT_PAD * 4))

    recon_pad, ml = pl.pallas_call(
        _cvae_kernel,
        out_shape=out_shape,
        grid=grid,
        in_specs=in_specs,
        out_specs=out_specs,
        compiler_params=pltpu.CompilerParams(dimension_semantics=("parallel",)),
        cost_estimate=pl.CostEstimate(flops=flops,
                                      transcendentals=B_pad * D_LAT_PAD,
                                      bytes_accessed=bytes_accessed),
    )(*ins)

    # Interface parity with the PyTorch module (f32 outputs, unpadded shapes).
    recon = recon_pad[:B, :D_X].astype(f32)
    mu = ml[:B, _MU_LO:_MU_HI]
    logvar = ml[:B, _LV_LO:_LV_HI]
    return recon, mu, logvar


def cvae_forward_ref(x, y, eps, params):
    """Pure-JAX f32 reference mirroring the PyTorch forward."""
    h = jnp.concatenate([x, y], axis=1)
    h = jax.nn.relu(h @ params["w1"] + params["b1"])
    h = jax.nn.relu(h @ params["w2"] + params["b2"])
    mu = h @ params["w31"] + params["b31"]
    logvar = h @ params["w32"] + params["b32"]
    z = mu + eps * jnp.exp(0.5 * logvar)
    d = jnp.concatenate([z, y], axis=1)
    d = jax.nn.relu(d @ params["w4"] + params["b4"])
    d = jax.nn.relu(d @ params["w5"] + params["b5"])
    recon = d @ params["w6"] + params["b6"]
    return recon, mu, logvar


if __name__ == "__main__":
    key = jax.random.PRNGKey(0)
    k_par, k_x, k_y, k_eps = jax.random.split(key, 4)

    B = 8
    params = init_params(k_par)
    x = jax.random.normal(k_x, (B, D_X), dtype=jnp.float32)
    y = jax.random.normal(k_y, (B, D_Y), dtype=jnp.float32)
    # torch.randn_like(std): sampled here deterministically and fed to the kernel
    eps = jax.random.normal(k_eps, (B, D_Z), dtype=jnp.float32)

    recon, mu, logvar = cvae_forward(x, y, eps, params)
    jax.block_until_ready((recon, mu, logvar))

    r_ref, mu_ref, lv_ref = cvae_forward_ref(x, y, eps, params)
    assert recon.shape == (B, D_X) and mu.shape == (B, D_Z) and logvar.shape == (B, D_Z)
    # bf16 matmul operands / bf16 eps,y slab / bf16 recon writeback (f32 accumulation)
    # -> compare with tolerances sized for bf16.
    assert jnp.allclose(mu, mu_ref, atol=2e-2, rtol=2e-2)
    assert jnp.allclose(logvar, lv_ref, atol=2e-2, rtol=2e-2)
    assert jnp.allclose(recon, r_ref, atol=6e-2, rtol=6e-2)

    print("KERNEL_OK")
</pallas_src>

<mosaic_0001>
module attributes {stable_mosaic.version = 11 : i64} {
  func.func @_cvae_kernel(%arg0: i32, %arg1: memref<16x256xbf16, #tpu.memory_space<vmem>>, %arg2: memref<16x128xbf16, #tpu.memory_space<vmem>>, %arg3: memref<256x128xbf16, #tpu.memory_space<vmem>>, %arg4: memref<1x128xf32, #tpu.memory_space<vmem>>, %arg5: memref<128x64xbf16, #tpu.memory_space<vmem>>, %arg6: memref<1x64xf32, #tpu.memory_space<vmem>>, %arg7: memref<64x128xbf16, #tpu.memory_space<vmem>>, %arg8: memref<1x128xf32, #tpu.memory_space<vmem>>, %arg9: memref<128x64xbf16, #tpu.memory_space<vmem>>, %arg10: memref<1x64xf32, #tpu.memory_space<vmem>>, %arg11: memref<64x128xbf16, #tpu.memory_space<vmem>>, %arg12: memref<1x128xf32, #tpu.memory_space<vmem>>, %arg13: memref<128x256xbf16, #tpu.memory_space<vmem>>, %arg14: memref<1x256xf32, #tpu.memory_space<vmem>>, %arg15: memref<16x256xbf16, #tpu.memory_space<vmem>>, %arg16: memref<16x128xf32, #tpu.memory_space<vmem>>) attributes {dimension_semantics = [#tpu.dimension_semantics<parallel>], iteration_bounds = array<i64: 1>, scalar_prefetch = 0 : i64, scratch_operands = 0 : i64, tpu.core_type = #tpu.core_type<tc>, window_params = [{transform_indices = @transform_0, window_bounds = array<i64: 16, 256>}, {transform_indices = @transform_1, window_bounds = array<i64: 16, 128>}, {pipeline_mode = #tpu.pipeline_mode<synchronous>, transform_indices = @transform_2, window_bounds = array<i64: 256, 128>}, {pipeline_mode = #tpu.pipeline_mode<synchronous>, transform_indices = @transform_3, window_bounds = array<i64: 1, 128>}, {pipeline_mode = #tpu.pipeline_mode<synchronous>, transform_indices = @transform_4, window_bounds = array<i64: 128, 64>}, {pipeline_mode = #tpu.pipeline_mode<synchronous>, transform_indices = @transform_5, window_bounds = array<i64: 1, 64>}, {pipeline_mode = #tpu.pipeline_mode<synchronous>, transform_indices = @transform_6, window_bounds = array<i64: 64, 128>}, {pipeline_mode = #tpu.pipeline_mode<synchronous>, transform_indices = @transform_7, window_bounds = array<i64: 1, 128>}, {pipeline_mode = #tpu.pipeline_mode<synchronous>, transform_indices = @transform_8, window_bounds = array<i64: 128, 64>}, {pipeline_mode = #tpu.pipeline_mode<synchronous>, transform_indices = @transform_9, window_bounds = array<i64: 1, 64>}, {pipeline_mode = #tpu.pipeline_mode<synchronous>, transform_indices = @transform_10, window_bounds = array<i64: 64, 128>}, {pipeline_mode = #tpu.pipeline_mode<synchronous>, transform_indices = @transform_11, window_bounds = array<i64: 1, 128>}, {pipeline_mode = #tpu.pipeline_mode<synchronous>, transform_indices = @transform_12, window_bounds = array<i64: 128, 256>}, {pipeline_mode = #tpu.pipeline_mode<synchronous>, transform_indices = @transform_13, window_bounds = array<i64: 1, 256>}, {transform_indices = @transform_14, window_bounds = array<i64: 16, 256>}, {transform_indices = @transform_15, window_bounds = array<i64: 16, 128>}]} {
    %c0 = arith.constant 0 : index
    %c0_0 = arith.constant 0 : index
    %0 = vector.load %arg1[%c0, %c0_0] : memref<16x256xbf16, #tpu.memory_space<vmem>>, vector<16x256xbf16>
    %c0_1 = arith.constant 0 : index
    %c0_2 = arith.constant 0 : index
    %1 = vector.load %arg3[%c0_1, %c0_2] : memref<256x128xbf16, #tpu.memory_space<vmem>>, vector<256x128xbf16>
    %cst = arith.constant dense<0.000000e+00> : vector<16x128xf32>
    %2 = tpu.matmul %0, %1, %cst {dimension_numbers = #tpu.dot_dimension_numbers<[1], [0], [0], [1], [0, 0, 1, 1], [], []>} : vector<16x256xbf16>, vector<256x128xbf16>, vector<16x128xf32> -> vector<16x128xf32>
    %c0_3 = arith.constant 0 : index
    %c0_4 = arith.constant 0 : index
    %3 = vector.load %arg4[%c0_3, %c0_4] : memref<1x128xf32, #tpu.memory_space<vmem>>, vector<1x128xf32>
    %4 = vector.broadcast %3 : vector<1x128xf32> to vector<16x128xf32>
    %5 = arith.addf %2, %4 : vector<16x128xf32>
    %cst_5 = arith.constant 0.000000e+00 : f32
    %6 = vector.broadcast %cst_5 : f32 to vector<16x128xf32>
    %7 = arith.maximumf %5, %6 : vector<16x128xf32>
    %8 = arith.truncf %7 : vector<16x128xf32> to vector<16x128xbf16>
    %c0_6 = arith.constant 0 : index
    %c0_7 = arith.constant 0 : index
    %9 = vector.load %arg5[%c0_6, %c0_7] : memref<128x64xbf16, #tpu.memory_space<vmem>>, vector<128x64xbf16>
    %cst_8 = arith.constant dense<0.000000e+00> : vector<16x64xf32>
    %10 = tpu.matmul %8, %9, %cst_8 {dimension_numbers = #tpu.dot_dimension_numbers<[1], [0], [0], [1], [0, 0, 1, 1], [], []>} : vector<16x128xbf16>, vector<128x64xbf16>, vector<16x64xf32> -> vector<16x64xf32>
    %c0_9 = arith.constant 0 : index
    %c0_10 = arith.constant 0 : index
    %11 = vector.load %arg6[%c0_9, %c0_10] : memref<1x64xf32, #tpu.memory_space<vmem>>, vector<1x64xf32>
    %12 = vector.broadcast %11 : vector<1x64xf32> to vector<16x64xf32>
    %13 = arith.addf %10, %12 : vector<16x64xf32>
    %cst_11 = arith.constant 0.000000e+00 : f32
    %14 = vector.broadcast %cst_11 : f32 to vector<16x64xf32>
    %15 = arith.maximumf %13, %14 : vector<16x64xf32>
    %16 = arith.truncf %15 : vector<16x64xf32> to vector<16x64xbf16>
    %c0_12 = arith.constant 0 : index
    %c0_13 = arith.constant 0 : index
    %17 = vector.load %arg7[%c0_12, %c0_13] : memref<64x128xbf16, #tpu.memory_space<vmem>>, vector<64x128xbf16>
    %cst_14 = arith.constant dense<0.000000e+00> : vector<16x128xf32>
    %18 = tpu.matmul %16, %17, %cst_14 {dimension_numbers = #tpu.dot_dimension_numbers<[1], [0], [0], [1], [0, 0, 1, 1], [], []>} : vector<16x64xbf16>, vector<64x128xbf16>, vector<16x128xf32> -> vector<16x128xf32>
    %c0_15 = arith.constant 0 : index
    %c0_16 = arith.constant 0 : index
    %19 = vector.load %arg8[%c0_15, %c0_16] : memref<1x128xf32, #tpu.memory_space<vmem>>, vector<1x128xf32>
    %20 = vector.broadcast %19 : vector<1x128xf32> to vector<16x128xf32>
    %21 = arith.addf %18, %20 : vector<16x128xf32>
    %c0_17 = arith.constant 0 : index
    %c0_18 = arith.constant 0 : index
    %22 = vector.load %arg16[%c0_17, %c0_18] : memref<16x128xf32, #tpu.memory_space<vmem>>, vector<16x128xf32>
    tpu.vector_store %arg16[%c0_17, %c0_18], %21 {strides = array<i32>} : memref<16x128xf32, #tpu.memory_space<vmem>>, vector<16x128xf32>,
    %c0_19 = arith.constant 0 : index
    %c0_20 = arith.constant 0 : index
    %23 = vector.load %arg2[%c0_19, %c0_20] : memref<16x128xbf16, #tpu.memory_space<vmem>>, vector<16x128xbf16>
    %24 = arith.extf %23 : vector<16x128xbf16> to vector<16x128xf32>
    %cst_21 = arith.constant 5.000000e-01 : f32
    %25 = vector.broadcast %cst_21 : f32 to vector<16x128xf32>
    %26 = arith.mulf %25, %21 : vector<16x128xf32>
    %27 = math.exp %26 : vector<16x128xf32>
    %28 = arith.mulf %24, %27 : vector<16x128xf32>
    %29 = tpu.iota {dimensions = array<i32: 1>} : vector<16x128xi32>
    %c4_i32 = arith.constant 4 : i32
    %30 = vector.broadcast %c4_i32 : i32 to vector<16x128xi32>
    %31 = arith.cmpi slt, %29, %30 : vector<16x128xi32>
    %cst_22 = arith.constant 0.000000e+00 : f32
    %32 = vector.broadcast %cst_22 : f32 to vector<16x128xf32>
    %33 = arith.select %31, %21, %32 : vector<16x128xi1>, vector<16x128xf32>
    %34 = arith.addf %33, %28 : vector<16x128xf32>
    %35 = arith.truncf %34 : vector<16x128xf32> to vector<16x128xbf16>
    %c0_23 = arith.constant 0 : index
    %c0_24 = arith.constant 0 : index
    %36 = vector.load %arg9[%c0_23, %c0_24] : memref<128x64xbf16, #tpu.memory_space<vmem>>, vector<128x64xbf16>
    %cst_25 = arith.constant dense<0.000000e+00> : vector<16x64xf32>
    %37 = tpu.matmul %35, %36, %cst_25 {dimension_numbers = #tpu.dot_dimension_numbers<[1], [0], [0], [1], [0, 0, 1, 1], [], []>} : vector<16x128xbf16>, vector<128x64xbf16>, vector<16x64xf32> -> vector<16x64xf32>
    %c0_26 = arith.constant 0 : index
    %c0_27 = arith.constant 0 : index
    %38 = vector.load %arg10[%c0_26, %c0_27] : memref<1x64xf32, #tpu.memory_space<vmem>>, vector<1x64xf32>
    %39 = vector.broadcast %38 : vector<1x64xf32> to vector<16x64xf32>
    %40 = arith.addf %37, %39 : vector<16x64xf32>
    %cst_28 = arith.constant 0.000000e+00 : f32
    %41 = vector.broadcast %cst_28 : f32 to vector<16x64xf32>
    %42 = arith.maximumf %40, %41 : vector<16x64xf32>
    %43 = arith.truncf %42 : vector<16x64xf32> to vector<16x64xbf16>
    %c0_29 = arith.constant 0 : index
    %c0_30 = arith.constant 0 : index
    %44 = vector.load %arg11[%c0_29, %c0_30] : memref<64x128xbf16, #tpu.memory_space<vmem>>, vector<64x128xbf16>
    %cst_31 = arith.constant dense<0.000000e+00> : vector<16x128xf32>
    %45 = tpu.matmul %43, %44, %cst_31 {dimension_numbers = #tpu.dot_dimension_numbers<[1], [0], [0], [1], [0, 0, 1, 1], [], []>} : vector<16x64xbf16>, vector<64x128xbf16>, vector<16x128xf32> -> vector<16x128xf32>
    %c0_32 = arith.constant 0 : index
    %c0_33 = arith.constant 0 : index
    %46 = vector.load %arg12[%c0_32, %c0_33] : memref<1x128xf32, #tpu.memory_space<vmem>>, vector<1x128xf32>
    %47 = vector.broadcast %46 : vector<1x128xf32> to vector<16x128xf32>
    %48 = arith.addf %45, %47 : vector<16x128xf32>
    %cst_34 = arith.constant 0.000000e+00 : f32
    %49 = vector.broadcast %cst_34 : f32 to vector<16x128xf32>
    %50 = arith.maximumf %48, %49 : vector<16x128xf32>
    %51 = arith.truncf %50 : vector<16x128xf32> to vector<16x128xbf16>
    %c0_35 = arith.constant 0 : index
    %c0_36 = arith.constant 0 : index
    %52 = vector.load %arg13[%c0_35, %c0_36] : memref<128x256xbf16, #tpu.memory_space<vmem>>, vector<128x256xbf16>
    %cst_37 = arith.constant dense<0.000000e+00> : vector<16x256xf32>
    %53 = tpu.matmul %51, %52, %cst_37 {dimension_numbers = #tpu.dot_dimension_numbers<[1], [0], [0], [1], [0, 0, 1, 1], [], []>} : vector<16x128xbf16>, vector<128x256xbf16>, vector<16x256xf32> -> vector<16x256xf32>
    %c0_38 = arith.constant 0 : index
    %c0_39 = arith.constant 0 : index
    %54 = vector.load %arg14[%c0_38, %c0_39] : memref<1x256xf32, #tpu.memory_space<vmem>>, vector<1x256xf32>
    %55 = vector.broadcast %54 : vector<1x256xf32> to vector<16x256xf32>
    %56 = arith.addf %53, %55 : vector<16x256xf32>
    %57 = arith.truncf %56 : vector<16x256xf32> to vector<16x256xbf16>
    %c0_40 = arith.constant 0 : index
    %c0_41 = arith.constant 0 : index
    %58 = vector.load %arg15[%c0_40, %c0_41] : memref<16x256xbf16, #tpu.memory_space<vmem>>, vector<16x256xbf16>
    tpu.vector_store %arg15[%c0_40, %c0_41], %57 {strides = array<i32>} : memref<16x256xbf16, #tpu.memory_space<vmem>>, vector<16x256xbf16>,
    return
  }
  func.func @transform_0(%arg0: i32) -> (i32, i32) {
    %c0_i32 = arith.constant 0 : i32
    %c0_i32_0 = arith.constant 0 : i32
    return %arg0, %c0_i32 : i32, i32
  }
  func.func @transform_1(%arg0: i32) -> (i32, i32) {
    %c0_i32 = arith.constant 0 : i32
    %c0_i32_0 = arith.constant 0 : i32
    return %arg0, %c0_i32 : i32, i32
  }
  func.func @transform_2(%arg0: i32) -> (i32, i32) {
    %c0_i32 = arith.constant 0 : i32
    %c0_i32_0 = arith.constant 0 : i32
    %c0_i32_1 = arith.constant 0 : i32
    return %c0_i32, %c0_i32_0 : i32, i32
  }
  func.func @transform_3(%arg0: i32) -> (i32, i32) {
    %c0_i32 = arith.constant 0 : i32
    %c0_i32_0 = arith.constant 0 : i32
    %c0_i32_1 = arith.constant 0 : i32
    return %c0_i32, %c0_i32_0 : i32, i32
  }
  func.func @transform_4(%arg0: i32) -> (i32, i32) {
    %c0_i32 = arith.constant 0 : i32
    %c0_i32_0 = arith.constant 0 : i32
    %c0_i32_1 = arith.constant 0 : i32
    return %c0_i32, %c0_i32_0 : i32, i32
  }
  func.func @transform_5(%arg0: i32) -> (i32, i32) {
    %c0_i32 = arith.constant 0 : i32
    %c0_i32_0 = arith.constant 0 : i32
    %c0_i32_1 = arith.constant 0 : i32
    return %c0_i32, %c0_i32_0 : i32, i32
  }
  func.func @transform_6(%arg0: i32) -> (i32, i32) {
    %c0_i32 = arith.constant 0 : i32
    %c0_i32_0 = arith.constant 0 : i32
    %c0_i32_1 = arith.constant 0 : i32
    return %c0_i32, %c0_i32_0 : i32, i32
  }
  func.func @transform_7(%arg0: i32) -> (i32, i32) {
    %c0_i32 = arith.constant 0 : i32
    %c0_i32_0 = arith.constant 0 : i32
    %c0_i32_1 = arith.constant 0 : i32
    return %c0_i32, %c0_i32_0 : i32, i32
  }
  func.func @transform_8(%arg0: i32) -> (i32, i32) {
    %c0_i32 = arith.constant 0 : i32
    %c0_i32_0 = arith.constant 0 : i32
    %c0_i32_1 = arith.constant 0 : i32
    return %c0_i32, %c0_i32_0 : i32, i32
  }
  func.func @transform_9(%arg0: i32) -> (i32, i32) {
    %c0_i32 = arith.constant 0 : i32
    %c0_i32_0 = arith.constant 0 : i32
    %c0_i32_1 = arith.constant 0 : i32
    return %c0_i32, %c0_i32_0 : i32, i32
  }
  func.func @transform_10(%arg0: i32) -> (i32, i32) {
    %c0_i32 = arith.constant 0 : i32
    %c0_i32_0 = arith.constant 0 : i32
    %c0_i32_1 = arith.constant 0 : i32
    return %c0_i32, %c0_i32_0 : i32, i32
  }
  func.func @transform_11(%arg0: i32) -> (i32, i32) {
    %c0_i32 = arith.constant 0 : i32
    %c0_i32_0 = arith.constant 0 : i32
    %c0_i32_1 = arith.constant 0 : i32
    return %c0_i32, %c0_i32_0 : i32, i32
  }
  func.func @transform_12(%arg0: i32) -> (i32, i32) {
    %c0_i32 = arith.constant 0 : i32
    %c0_i32_0 = arith.constant 0 : i32
    %c0_i32_1 = arith.constant 0 : i32
    return %c0_i32, %c0_i32_0 : i32, i32
  }
  func.func @transform_13(%arg0: i32) -> (i32, i32) {
    %c0_i32 = arith.constant 0 : i32
    %c0_i32_0 = arith.constant 0 : i32
    %c0_i32_1 = arith.constant 0 : i32
    return %c0_i32, %c0_i32_0 : i32, i32
  }
  func.func @transform_14(%arg0: i32) -> (i32, i32) {
    %c0_i32 = arith.constant 0 : i32
    %c0_i32_0 = arith.constant 0 : i32
    return %arg0, %c0_i32 : i32, i32
  }
  func.func @transform_15(%arg0: i32) -> (i32, i32) {
    %c0_i32 = arith.constant 0 : i32
    %c0_i32_0 = arith.constant 0 : i32
    return %arg0, %c0_i32 : i32, i32
  }
}

</mosaic_0001>

<llo_original>
// kernel: cvae_forward.1
$region0: #{cvae_forward.1}
  #allocation0 [shape = 'u32[]', space=smem, size = 0x4, offset = 0x4, fixed_abs, tag = 'smem constant byte address 0x4 - core index']
  #allocation1 [shape = 'u32[144,128]{1,0:T(1,128)}', space=vmem, size = 0x12000, scoped, tag = 'internal scratch']
  %s0 = inlined_call_operand.vmem [shape: bf16[16,256], index: 0, kind: input, shape index: {}]
  %s1 = inlined_call_operand.vmem [shape: bf16[16,128], index: 1, kind: input, shape index: {}]
  %s2 = inlined_call_operand.vmem [shape: bf16[256,128], index: 2, kind: input, shape index: {}]
  %s3 = inlined_call_operand.vmem [shape: f32[1,128], index: 3, kind: input, shape index: {}]
  %s4 = inlined_call_operand.vmem [shape: bf16[128,64], index: 4, kind: input, shape index: {}]
  %s5 = inlined_call_operand.vmem [shape: f32[1,64], index: 5, kind: input, shape index: {}]
  %s6 = inlined_call_operand.vmem [shape: bf16[64,128], index: 6, kind: input, shape index: {}]
  %s7 = inlined_call_operand.vmem [shape: f32[1,128], index: 7, kind: input, shape index: {}]
  %s8 = inlined_call_operand.vmem [shape: bf16[128,64], index: 8, kind: input, shape index: {}]
  %s9 = inlined_call_operand.vmem [shape: f32[1,64], index: 9, kind: input, shape index: {}]
  %s10 = inlined_call_operand.vmem [shape: bf16[64,128], index: 10, kind: input, shape index: {}]
  %s11 = inlined_call_operand.vmem [shape: f32[1,128], index: 11, kind: input, shape index: {}]
  %s12 = inlined_call_operand.vmem [shape: bf16[128,256], index: 12, kind: input, shape index: {}]
  %s13 = inlined_call_operand.vmem [shape: f32[1,256], index: 13, kind: input, shape index: {}]
  %s14 = inlined_call_operand.vmem [shape: bf16[16,256], index: 14, kind: output, shape index: {0}]
  %s15 = inlined_call_operand.vmem [shape: f32[16,128], index: 15, kind: output, shape index: {1}]
  %16 = xla_tuple %s14, %s15
  %s17 = sld [smem:[#allocation0]]
  $region74: #{cvae_forward.1} parent=0
    _
  %s19 = ssub.s32 1, %s17
  %s20 = scalar_select 0, %s19, %s17
  // Predicated region
  $region2: #{cvae_forward.1} parent=0 // pred_check
    _
  $region3: #{cvae_forward.1} parent=0 // pred_check_branch
    %22 = sbr.rel (0) target = $region5
  $region4: #{cvae_forward.1} parent=0 // pred_region
    _
  $region5: #{cvae_forward.1} parent=0 // pred_fallthru
    _
  // Predicated region
  $region6: #{cvae_forward.1} parent=0 // pred_check
    _
  $region7: #{cvae_forward.1} parent=0 // pred_check_branch
    %24 = sbr.rel (0) target = $region9
  $region8: #{cvae_forward.1} parent=0 // pred_region
    _
  $region9: #{cvae_forward.1} parent=0 // pred_fallthru
    _
  // Predicated region
  $region10: #{cvae_forward.1} parent=0 // pred_check
    _
  $region11: #{cvae_forward.1} parent=0 // pred_check_branch
    %26 = sbr.rel (0) target = $region13
  $region12: #{cvae_forward.1} parent=0 // pred_region
    _
  $region13: #{cvae_forward.1} parent=0 // pred_fallthru
    _
  // Predicated region
  $region14: #{cvae_forward.1} parent=0 // pred_check
    _
  $region15: #{cvae_forward.1} parent=0 // pred_check_branch
    %28 = sbr.rel (0) target = $region17
  $region16: #{cvae_forward.1} parent=0 // pred_region
    _
  $region17: #{cvae_forward.1} parent=0 // pred_fallthru
    _
  // Predicated region
  $region18: #{cvae_forward.1} parent=0 // pred_check
    _
  $region19: #{cvae_forward.1} parent=0 // pred_check_branch
    %30 = sbr.rel (0) target = $region21
  $region20: #{cvae_forward.1} parent=0 // pred_region
    _
  $region21: #{cvae_forward.1} parent=0 // pred_fallthru
    _
  // Predicated region
  $region22: #{cvae_forward.1} parent=0 // pred_check
    _
  $region23: #{cvae_forward.1} parent=0 // pred_check_branch
    %32 = sbr.rel (0) target = $region25
  $region24: #{cvae_forward.1} parent=0 // pred_region
    _
  $region25: #{cvae_forward.1} parent=0 // pred_fallthru
    _
  // Predicated region
  $region26: #{cvae_forward.1} parent=0 // pred_check
    _
  $region27: #{cvae_forward.1} parent=0 // pred_check_branch
    %34 = sbr.rel (0) target = $region29
  $region28: #{cvae_forward.1} parent=0 // pred_region
    _
  $region29: #{cvae_forward.1} parent=0 // pred_fallthru
    _
  // Predicated region
  $region30: #{cvae_forward.1} parent=0 // pred_check
    _
  $region31: #{cvae_forward.1} parent=0 // pred_check_branch
    %36 = sbr.rel (0) target = $region33
  $region32: #{cvae_forward.1} parent=0 // pred_region
    _
  $region33: #{cvae_forward.1} parent=0 // pred_fallthru
    _
  // Predicated region
  $region34: #{cvae_forward.1} parent=0 // pred_check
    _
  $region35: #{cvae_forward.1} parent=0 // pred_check_branch
    %38 = sbr.rel (0) target = $region37
  $region36: #{cvae_forward.1} parent=0 // pred_region
    _
  $region37: #{cvae_forward.1} parent=0 // pred_fallthru
    _
  // Predicated region
  $region38: #{cvae_forward.1} parent=0 // pred_check
    _
  $region39: #{cvae_forward.1} parent=0 // pred_check_branch
    %40 = sbr.rel (0) target = $region41
  $region40: #{cvae_forward.1} parent=0 // pred_region
    _
  $region41: #{cvae_forward.1} parent=0 // pred_fallthru
    _
  // Predicated region
  $region42: #{cvae_forward.1} parent=0 // pred_check
    _
  $region43: #{cvae_forward.1} parent=0 // pred_check_branch
    %42 = sbr.rel (0) target = $region45
  $region44: #{cvae_forward.1} parent=0 // pred_region
    _
  $region45: #{cvae_forward.1} parent=0 // pred_fallthru
    _
  // Predicated region
  $region46: #{cvae_forward.1} parent=0 // pred_check
    _
  $region47: #{cvae_forward.1} parent=0 // pred_check_branch
    %44 = sbr.rel (0) target = $region49
  $region48: #{cvae_forward.1} parent=0 // pred_region
    _
  $region49: #{cvae_forward.1} parent=0 // pred_fallthru
    _
  // Predicated region
  $region50: #{cvae_forward.1} parent=0 // pred_check
    _
  $region51: #{cvae_forward.1} parent=0 // pred_check_branch
    %46 = sbr.rel (0) target = $region53
  $region52: #{cvae_forward.1} parent=0 // pred_region
    _
  $region53: #{cvae_forward.1} parent=0 // pred_fallthru
    _
  // Predicated region
  $region54: #{cvae_forward.1} parent=0 // pred_check
    _
  $region55: #{cvae_forward.1} parent=0 // pred_check_branch
    %48 = sbr.rel (0) target = $region57
  $region56: #{cvae_forward.1} parent=0 // pred_region
    _
  $region57: #{cvae_forward.1} parent=0 // pred_fallthru
    _
  %v50 = vld [vmem:[%s0] sm:$0xff]
  %v51 = vld [vmem:[%s0 + $0x8] sm:$0xff]
  %v52 = vld [vmem:[%s2] sm:$0xf]
  %v53 = vld [vmem:[%s2 + $0x4] sm:$0xf]
  %v54 = vld [vmem:[%s2 + $0x8] sm:$0xf]
  %v55 = vld [vmem:[%s2 + $0xc] sm:$0xf]
  %v56 = vld [vmem:[%s2 + $0x10] sm:$0xf]
  %v57 = vld [vmem:[%s2 + $0x14] sm:$0xf]
  %v58 = vld [vmem:[%s2 + $0x18] sm:$0xf]
  %v59 = vld [vmem:[%s2 + $0x1c] sm:$0xf]
  %v60 = vld [vmem:[%s2 + $0x20] sm:$0xf]
  %v61 = vld [vmem:[%s2 + $0x24] sm:$0xf]
  %v62 = vld [vmem:[%s2 + $0x28] sm:$0xf]
  %v63 = vld [vmem:[%s2 + $0x2c] sm:$0xf]
  %v64 = vld [vmem:[%s2 + $0x30] sm:$0xf]
  %v65 = vld [vmem:[%s2 + $0x34] sm:$0xf]
  %v66 = vld [vmem:[%s2 + $0x38] sm:$0xf]
  %v67 = vld [vmem:[%s2 + $0x3c] sm:$0xf]
  %v68 = vld [vmem:[%s2 + $0x40] sm:$0xf]
  %v69 = vld [vmem:[%s2 + $0x44] sm:$0xf]
  %v70 = vld [vmem:[%s2 + $0x48] sm:$0xf]
  %v71 = vld [vmem:[%s2 + $0x4c] sm:$0xf]
  %v72 = vld [vmem:[%s2 + $0x50] sm:$0xf]
  %v73 = vld [vmem:[%s2 + $0x54] sm:$0xf]
  %v74 = vld [vmem:[%s2 + $0x58] sm:$0xf]
  %v75 = vld [vmem:[%s2 + $0x5c] sm:$0xf]
  %v76 = vld [vmem:[%s2 + $0x60] sm:$0xf]
  %v77 = vld [vmem:[%s2 + $0x64] sm:$0xf]
  %v78 = vld [vmem:[%s2 + $0x68] sm:$0xf]
  %v79 = vld [vmem:[%s2 + $0x6c] sm:$0xf]
  %v80 = vld [vmem:[%s2 + $0x70] sm:$0xf]
  %v81 = vld [vmem:[%s2 + $0x74] sm:$0xf]
  %v82 = vld [vmem:[%s2 + $0x78] sm:$0xf]
  %v83 = vld [vmem:[%s2 + $0x7c] sm:$0xf]
  %v84 = vld [vmem:[%s3] sm:$0x1]
  %v86 = vlaneseq
  %v87 = vshrl.u32 %v86, 7
  %v88 = vsub.s32 0, %v87
  %v89 = vrot.slane %v84, %v88
  %v93 = vunpack.c.l.b16 %v50
  %v94 = vunpack.c.h.b16 %v50
  %v95 = vunpack.c.l.b16 %v51
  %v96 = vunpack.c.h.b16 %v51
  %v97 = vpack.c.b16 %v95, %v93
  %v98 = vpack.c.b16 %v96, %v94
  %v133 = vunpack.c.l.b16 %v52
  %v134 = vunpack.c.l.b16 %v53
  %v135 = vunpack.c.l.b16 %v54
  %v136 = vunpack.c.l.b16 %v55
  %v137 = vunpack.c.l.b16 %v56
  %v138 = vunpack.c.l.b16 %v57
  %v139 = vunpack.c.l.b16 %v58
  %v140 = vunpack.c.l.b16 %v59
  %v141 = vunpack.c.l.b16 %v60
  %v142 = vunpack.c.l.b16 %v61
  %v143 = vunpack.c.l.b16 %v62
  %v144 = vunpack.c.l.b16 %v63
  %v145 = vunpack.c.l.b16 %v64
  %v146 = vunpack.c.l.b16 %v65
  %v147 = vunpack.c.l.b16 %v66
  %v148 = vunpack.c.l.b16 %v67
  %v149 = vunpack.c.l.b16 %v68
  %v150 = vunpack.c.l.b16 %v69
  %v151 = vunpack.c.l.b16 %v70
  %v152 = vunpack.c.l.b16 %v71
  %v153 = vunpack.c.l.b16 %v72
  %v154 = vunpack.c.l.b16 %v73
  %v155 = vunpack.c.l.b16 %v74
  %v156 = vunpack.c.l.b16 %v75
  %v157 = vunpack.c.l.b16 %v76
  %v158 = vunpack.c.l.b16 %v77
  %v159 = vunpack.c.l.b16 %v78
  %v160 = vunpack.c.l.b16 %v79
  %v161 = vunpack.c.l.b16 %v80
  %v162 = vunpack.c.l.b16 %v81
  %v163 = vunpack.c.l.b16 %v82
  %v164 = vunpack.c.l.b16 %v83
  %v165 = vpack.c.b16 %v134, %v133
  %v166 = vpack.c.b16 %v136, %v135
  %v167 = vpack.c.b16 %v138, %v137
  %v168 = vpack.c.b16 %v140, %v139
  %v169 = vpack.c.b16 %v142, %v141
  %v170 = vpack.c.b16 %v144, %v143
  %v171 = vpack.c.b16 %v146, %v145
  %v172 = vpack.c.b16 %v148, %v147
  %v173 = vpack.c.b16 %v150, %v149
  %v174 = vpack.c.b16 %v152, %v151
  %v175 = vpack.c.b16 %v154, %v153
  %v176 = vpack.c.b16 %v156, %v155
  %v177 = vpack.c.b16 %v158, %v157
  %v178 = vpack.c.b16 %v160, %v159
  %v179 = vpack.c.b16 %v162, %v161
  %v180 = vpack.c.b16 %v164, %v163
  %197 = vmatprep.subr.bf16.mxu0 0
  %198 = vmatpush1.bf16.msra.mxu0 %v165
  %199 = vmatprep.subr.bf16.mxu0 0
  %200 = vmatpush1.bf16.msra.mxu0 %v166
  %201 = vmatprep.subr.bf16.mxu0 0
  %202 = vmatpush1.bf16.msra.mxu0 %v167
  %203 = vmatprep.subr.bf16.mxu0 0
  %204 = vmatpush1.bf16.msra.mxu0 %v168
  %205 = vmatprep.subr.bf16.mxu0 0
  %206 = vmatpush1.bf16.msra.mxu0 %v169
  %207 = vmatprep.subr.bf16.mxu0 0
  %208 = vmatpush1.bf16.msra.mxu0 %v170
  %209 = vmatprep.subr.bf16.mxu0 0
  %210 = vmatpush1.bf16.msra.mxu0 %v171
  %211 = vmatprep.subr.bf16.mxu0 0
  %212 = vmatpush1.bf16.msra.mxu0 %v172
  %213 = vmatprep.subr.bf16.mxu0 0
  %214 = vmatpush1.bf16.msra.mxu0 %v173
  %215 = vmatprep.subr.bf16.mxu0 0
  %216 = vmatpush1.bf16.msra.mxu0 %v174
  %217 = vmatprep.subr.bf16.mxu0 0
  %218 = vmatpush1.bf16.msra.mxu0 %v175
  %219 = vmatprep.subr.bf16.mxu0 0
  %220 = vmatpush1.bf16.msra.mxu0 %v176
  %221 = vmatprep.subr.bf16.mxu0 0
  %222 = vmatpush1.bf16.msra.mxu0 %v177
  %223 = vmatprep.subr.bf16.mxu0 0
  %224 = vmatpush1.bf16.msra.mxu0 %v178
  %225 = vmatprep.subr.bf16.mxu0 0
  %226 = vmatpush1.bf16.msra.mxu0 %v179
  %227 = vmatprep.subr.bf16.mxu0 0
  %228 = vmatpush1.bf16.msra.mxu0 %v180
  %229 = vmatprep.mubr.bf16.mxu0 %v98
  %230 = vmatmul.mubr.bf16.gmra.mrb[0].mxu0 %v97
  %v231 = vpop.f32.mrb[0].mxu0
  %v232 = vadd.f32 %v89, %v231
  %v233 = vpop.f32.mrb[0].mxu0
  %v234 = vpop.f32.mrb[0].mxu0
  %v235 = vadd.f32 %v89, %v234
  %v236 = vpop.f32.mrb[0].mxu0
  %237 = vdwg.mxu0
  %v238 = vmax.f32 %v232, 0.0
  %v239 = vmax.f32 %v235, 0.0
  %v240 = vpack.c.bf16 %v239, %v238
  %v241 = vld [vmem:[%s4] sm:$0xf]
  %v242 = vld [vmem:[%s4 + $0x4] sm:$0xf]
  %v243 = vld [vmem:[%s4 + $0x8] sm:$0xf]
  %v244 = vld [vmem:[%s4 + $0xc] sm:$0xf]
  %v245 = vld [vmem:[%s4 + $0x10] sm:$0xf]
  %v246 = vld [vmem:[%s4 + $0x14] sm:$0xf]
  %v247 = vld [vmem:[%s4 + $0x18] sm:$0xf]
  %v248 = vld [vmem:[%s4 + $0x1c] sm:$0xf]
  %v249 = vld [vmem:[%s4 + $0x20] sm:$0xf]
  %v250 = vld [vmem:[%s4 + $0x24] sm:$0xf]
  %v251 = vld [vmem:[%s4 + $0x28] sm:$0xf]
  %v252 = vld [vmem:[%s4 + $0x2c] sm:$0xf]
  %v253 = vld [vmem:[%s4 + $0x30] sm:$0xf]
  %v254 = vld [vmem:[%s4 + $0x34] sm:$0xf]
  %v255 = vld [vmem:[%s4 + $0x38] sm:$0xf]
  %v256 = vld [vmem:[%s4 + $0x3c] sm:$0xf]
  %v257 = vld [vmem:[%s5] sm:$0x1]
  %v259 = vlaneseq
  %v260 = vshrl.u32 %v259, 7
  %v261 = vsub.s32 0, %v260
  %v262 = vrot.slane %v257, %v261
  %v280 = vunpack.c.l.b16 %v241
  %v281 = vunpack.c.l.b16 %v242
  %v282 = vunpack.c.l.b16 %v243
  %v283 = vunpack.c.l.b16 %v244
  %v284 = vunpack.c.l.b16 %v245
  %v285 = vunpack.c.l.b16 %v246
  %v286 = vunpack.c.l.b16 %v247
  %v287 = vunpack.c.l.b16 %v248
  %v288 = vunpack.c.l.b16 %v249
  %v289 = vunpack.c.l.b16 %v250
  %v290 = vunpack.c.l.b16 %v251
  %v291 = vunpack.c.l.b16 %v252
  %v292 = vunpack.c.l.b16 %v253
  %v293 = vunpack.c.l.b16 %v254
  %v294 = vunpack.c.l.b16 %v255
  %v295 = vunpack.c.l.b16 %v256
  %v296 = vpack.c.b16 %v281, %v280
  %v297 = vpack.c.b16 %v283, %v282
  %v298 = vpack.c.b16 %v285, %v284
  %v299 = vpack.c.b16 %v287, %v286
  %v300 = vpack.c.b16 %v289, %v288
  %v301 = vpack.c.b16 %v291, %v290
  %v302 = vpack.c.b16 %v293, %v292
  %v303 = vpack.c.b16 %v295, %v294
  %312 = vmatprep.subr.bf16.mxu0 0
  %313 = vmatpush1.bf16.msra.mxu0 %v296
  %314 = vmatprep.subr.bf16.mxu0 0
  %315 = vmatpush1.bf16.msra.mxu0 %v297
  %316 = vmatprep.subr.bf16.mxu0 0
  %317 = vmatpush1.bf16.msra.mxu0 %v298
  %318 = vmatprep.subr.bf16.mxu0 0
  %319 = vmatpush1.bf16.msra.mxu0 %v299
  %320 = vmatprep.subr.bf16.mxu0 0
  %321 = vmatpush1.bf16.msra.mxu0 %v300
  %322 = vmatprep.subr.bf16.mxu0 0
  %323 = vmatpush1.bf16.msra.mxu0 %v301
  %324 = vmatprep.subr.bf16.mxu0 0
  %325 = vmatpush1.bf16.msra.mxu0 %v302
  %326 = vmatprep.subr.bf16.mxu0 0
  %327 = vmatpush1.bf16.msra.mxu0 %v303
  %328 = vmatprep.subr.bf16.mxu0 0
  %329 = vmatpush1.bf16.msra.mxu0 0
  %330 = vmatprep.subr.bf16.mxu0 0
  %331 = vmatpush1.bf16.msra.mxu0 0
  %332 = vmatprep.subr.bf16.mxu0 0
  %333 = vmatpush1.bf16.msra.mxu0 0
  %334 = vmatprep.subr.bf16.mxu0 0
  %335 = vmatpush1.bf16.msra.mxu0 0
  %336 = vmatprep.subr.bf16.mxu0 0
  %337 = vmatpush1.bf16.msra.mxu0 0
  %338 = vmatprep.subr.bf16.mxu0 0
  %339 = vmatpush1.bf16.msra.mxu0 0
  %340 = vmatprep.subr.bf16.mxu0 0
  %341 = vmatpush1.bf16.msra.mxu0 0
  %342 = vmatprep.subr.bf16.mxu0 0
  %343 = vmatpush1.bf16.msra.mxu0 0
  %344 = vmatprep.mubr.bf16.mxu0 0
  %345 = vmatmul.mubr.bf16.gmra.mrb[0].mxu0 %v240
  %v346 = vpop.f32.mrb[0].mxu0
  %v347 = vadd.f32 %v262, %v346
  %v348 = vpop.f32.mrb[0].mxu0
  %v349 = vpop.f32.mrb[0].mxu0
  %v350 = vadd.f32 %v262, %v349
  %v351 = vpop.f32.mrb[0].mxu0
  %352 = vdwg.mxu0
  %v353 = vmax.f32 %v347, 0.0
  %v354 = vmax.f32 %v350, 0.0
  %v355 = vpack.c.bf16 %v354, %v353
  %v356 = vld [vmem:[%s6] sm:$0xf]
  %v357 = vld [vmem:[%s6 + $0x4] sm:$0xf]
  %v358 = vld [vmem:[%s6 + $0x8] sm:$0xf]
  %v359 = vld [vmem:[%s6 + $0xc] sm:$0xf]
  %v360 = vld [vmem:[%s6 + $0x10] sm:$0xf]
  %v361 = vld [vmem:[%s6 + $0x14] sm:$0xf]
  %v362 = vld [vmem:[%s6 + $0x18] sm:$0xf]
  %v363 = vld [vmem:[%s6 + $0x1c] sm:$0xf]
  %v364 = vld [vmem:[%s7] sm:$0x1]
  %v366 = vlaneseq
  %v367 = vshrl.u32 %v366, 7
  %v368 = vsub.s32 0, %v367
  %v369 = vrot.slane %v364, %v368
  %v379 = vunpack.c.l.b16 %v356
  %v380 = vunpack.c.l.b16 %v357
  %v381 = vunpack.c.l.b16 %v358
  %v382 = vunpack.c.l.b16 %v359
  %v383 = vunpack.c.l.b16 %v360
  %v384 = vunpack.c.l.b16 %v361
  %v385 = vunpack.c.l.b16 %v362
  %v386 = vunpack.c.l.b16 %v363
  %v387 = vpack.c.b16 %v380, %v379
  %v388 = vpack.c.b16 %v382, %v381
  %v389 = vpack.c.b16 %v384, %v383
  %v390 = vpack.c.b16 %v386, %v385
  %vm395 = vcmask 523264
  %v397 = vsel %vm395, %v355, 0
  %399 = vmatprep.subr.bf16.mxu0 0
  %400 = vmatpush1.bf16.msra.mxu0 %v387
  %401 = vmatprep.subr.bf16.mxu0 0
  %402 = vmatpush1.bf16.msra.mxu0 %v388
  %403 = vmatprep.subr.bf16.mxu0 0
  %404 = vmatpush1.bf16.msra.mxu0 %v389
  %405 = vmatprep.subr.bf16.mxu0 0
  %406 = vmatpush1.bf16.msra.mxu0 %v390
  %407 = vmatprep.subr.bf16.mxu0 0
  %408 = vmatpush1.bf16.msra.mxu0 0
  %409 = vmatprep.subr.bf16.mxu0 0
  %410 = vmatpush1.bf16.msra.mxu0 0
  %411 = vmatprep.subr.bf16.mxu0 0
  %412 = vmatpush1.bf16.msra.mxu0 0
  %413 = vmatprep.subr.bf16.mxu0 0
  %414 = vmatpush1.bf16.msra.mxu0 0
  %415 = vmatprep.subr.bf16.mxu0 0
  %416 = vmatpush1.bf16.msra.mxu0 0
  %417 = vmatprep.subr.bf16.mxu0 0
  %418 = vmatpush1.bf16.msra.mxu0 0
  %419 = vmatprep.subr.bf16.mxu0 0
  %420 = vmatpush1.bf16.msra.mxu0 0
  %421 = vmatprep.subr.bf16.mxu0 0
  %422 = vmatpush1.bf16.msra.mxu0 0
  %423 = vmatprep.subr.bf16.mxu0 0
  %424 = vmatpush1.bf16.msra.mxu0 0
  %425 = vmatprep.subr.bf16.mxu0 0
  %426 = vmatpush1.bf16.msra.mxu0 0
  %427 = vmatprep.subr.bf16.mxu0 0
  %428 = vmatpush1.bf16.msra.mxu0 0
  %429 = vmatprep.subr.bf16.mxu0 0
  %430 = vmatpush1.bf16.msra.mxu0 0
  %431 = vmatprep.mubr.bf16.mxu0 0
  %432 = vmatmul.mubr.bf16.gmra.mrb[0].mxu0 %v397
  %v433 = vpop.f32.mrb[0].mxu0
  %v434 = vadd.f32 %v369, %v433
  %v435 = vpop.f32.mrb[0].mxu0
  %v436 = vpop.f32.mrb[0].mxu0
  %v437 = vadd.f32 %v369, %v436
  %v438 = vpop.f32.mrb[0].mxu0
  %439 = vdwg.mxu0
  %440 = vst [vmem:[%s15] sm:$0xff] %v434
  %441 = vst [vmem:[%s15 + $0x8] sm:$0xff] %v437
  %v442 = vld [vmem:[%s1] sm:$0xf]
  %v443 = vld [vmem:[%s1 + $0x4] sm:$0xf]
  %v444 = vunpack.c.l.bf16 %v442
  %v445 = vunpack.c.l.bf16 %v443
  %v446 = vmul.f32 %v434, 0.5
  %v447 = vmul.f32 %v437, 0.5
  %v448 = vmul.f32 %v446, 1.442695
  %v449 = vpow.pop %v448
  %v450 = vmul.f32 %v447, 1.442695
  %v451 = vpow.pop %v450
  %v452 = vmul.f32 %v444, %v449
  %v453 = vmul.f32 %v445, %v451
  %v454 = vlaneseq
  %v455 = vand.u32 %v454, 127
  %vm456 = vcmp.lt.s32.totalorder %v455, 4
  %v457 = vsel %vm456, %v434, 0.0
  %v458 = vsel %vm456, %v437, 0.0
  %v459 = vadd.f32 %v457, %v452
  %v460 = vadd.f32 %v458, %v453
  %v461 = vpack.c.bf16 %v460, %v459
  %v462 = vld [vmem:[%s8] sm:$0xf]
  %v463 = vld [vmem:[%s8 + $0x4] sm:$0xf]
  %v464 = vld [vmem:[%s8 + $0x8] sm:$0xf]
  %v465 = vld [vmem:[%s8 + $0xc] sm:$0xf]
  %v466 = vld [vmem:[%s8 + $0x10] sm:$0xf]
  %v467 = vld [vmem:[%s8 + $0x14] sm:$0xf]
  %v468 = vld [vmem:[%s8 + $0x18] sm:$0xf]
  %v469 = vld [vmem:[%s8 + $0x1c] sm:$0xf]
  %v470 = vld [vmem:[%s8 + $0x20] sm:$0xf]
  %v471 = vld [vmem:[%s8 + $0x24] sm:$0xf]
  %v472 = vld [vmem:[%s8 + $0x28] sm:$0xf]
  %v473 = vld [vmem:[%s8 + $0x2c] sm:$0xf]
  %v474 = vld [vmem:[%s8 + $0x30] sm:$0xf]
  %v475 = vld [vmem:[%s8 + $0x34] sm:$0xf]
  %v476 = vld [vmem:[%s8 + $0x38] sm:$0xf]
  %v477 = vld [vmem:[%s8 + $0x3c] sm:$0xf]
  %v478 = vld [vmem:[%s9] sm:$0x1]
  %v480 = vlaneseq
  %v481 = vshrl.u32 %v480, 7
  %v482 = vsub.s32 0, %v481
  %v483 = vrot.slane %v478, %v482
  %v501 = vunpack.c.l.b16 %v462
  %v502 = vunpack.c.l.b16 %v463
  %v503 = vunpack.c.l.b16 %v464
  %v504 = vunpack.c.l.b16 %v465
  %v505 = vunpack.c.l.b16 %v466
  %v506 = vunpack.c.l.b16 %v467
  %v507 = vunpack.c.l.b16 %v468
  %v508 = vunpack.c.l.b16 %v469
  %v509 = vunpack.c.l.b16 %v470
  %v510 = vunpack.c.l.b16 %v471
  %v511 = vunpack.c.l.b16 %v472
  %v512 = vunpack.c.l.b16 %v473
  %v513 = vunpack.c.l.b16 %v474
  %v514 = vunpack.c.l.b16 %v475
  %v515 = vunpack.c.l.b16 %v476
  %v516 = vunpack.c.l.b16 %v477
  %v517 = vpack.c.b16 %v502, %v501
  %v518 = vpack.c.b16 %v504, %v503
  %v519 = vpack.c.b16 %v506, %v505
  %v520 = vpack.c.b16 %v508, %v507
  %v521 = vpack.c.b16 %v510, %v509
  %v522 = vpack.c.b16 %v512, %v511
  %v523 = vpack.c.b16 %v514, %v513
  %v524 = vpack.c.b16 %v516, %v515
  %533 = vmatprep.subr.bf16.mxu0 0
  %534 = vmatpush1.bf16.msra.mxu0 %v517
  %535 = vmatprep.subr.bf16.mxu0 0
  %536 = vmatpush1.bf16.msra.mxu0 %v518
  %537 = vmatprep.subr.bf16.mxu0 0
  %538 = vmatpush1.bf16.msra.mxu0 %v519
  %539 = vmatprep.subr.bf16.mxu0 0
  %540 = vmatpush1.bf16.msra.mxu0 %v520
  %541 = vmatprep.subr.bf16.mxu0 0
  %542 = vmatpush1.bf16.msra.mxu0 %v521
  %543 = vmatprep.subr.bf16.mxu0 0
  %544 = vmatpush1.bf16.msra.mxu0 %v522
  %545 = vmatprep.subr.bf16.mxu0 0
  %546 = vmatpush1.bf16.msra.mxu0 %v523
  %547 = vmatprep.subr.bf16.mxu0 0
  %548 = vmatpush1.bf16.msra.mxu0 %v524
  %549 = vmatprep.subr.bf16.mxu0 0
  %550 = vmatpush1.bf16.msra.mxu0 0
  %551 = vmatprep.subr.bf16.mxu0 0
  %552 = vmatpush1.bf16.msra.mxu0 0
  %553 = vmatprep.subr.bf16.mxu0 0
  %554 = vmatpush1.bf16.msra.mxu0 0
  %555 = vmatprep.subr.bf16.mxu0 0
  %556 = vmatpush1.bf16.msra.mxu0 0
  %557 = vmatprep.subr.bf16.mxu0 0
  %558 = vmatpush1.bf16.msra.mxu0 0
  %559 = vmatprep.subr.bf16.mxu0 0
  %560 = vmatpush1.bf16.msra.mxu0 0
  %561 = vmatprep.subr.bf16.mxu0 0
  %562 = vmatpush1.bf16.msra.mxu0 0
  %563 = vmatprep.subr.bf16.mxu0 0
  %564 = vmatpush1.bf16.msra.mxu0 0
  %565 = vmatprep.mubr.bf16.mxu0 0
  %566 = vmatmul.mubr.bf16.gmra.mrb[0].mxu0 %v461
  %v567 = vpop.f32.mrb[0].mxu0
  %v568 = vadd.f32 %v483, %v567
  %v569 = vpop.f32.mrb[0].mxu0
  %v570 = vpop.f32.mrb[0].mxu0
  %v571 = vadd.f32 %v483, %v570
  %v572 = vpop.f32.mrb[0].mxu0
  %573 = vdwg.mxu0
  %v574 = vmax.f32 %v568, 0.0
  %v575 = vmax.f32 %v571, 0.0
  %v576 = vpack.c.bf16 %v575, %v574
  %v577 = vld [vmem:[%s10] sm:$0xf]
  %v578 = vld [vmem:[%s10 + $0x4] sm:$0xf]
  %v579 = vld [vmem:[%s10 + $0x8] sm:$0xf]
  %v580 = vld [vmem:[%s10 + $0xc] sm:$0xf]
  %v581 = vld [vmem:[%s10 + $0x10] sm:$0xf]
  %v582 = vld [vmem:[%s10 + $0x14] sm:$0xf]
  %v583 = vld [vmem:[%s10 + $0x18] sm:$0xf]
  %v584 = vld [vmem:[%s10 + $0x1c] sm:$0xf]
  %v585 = vld [vmem:[%s11] sm:$0x1]
  %v587 = vlaneseq
  %v588 = vshrl.u32 %v587, 7
  %v589 = vsub.s32 0, %v588
  %v590 = vrot.slane %v585, %v589
  %v600 = vunpack.c.l.b16 %v577
  %v601 = vunpack.c.l.b16 %v578
  %v602 = vunpack.c.l.b16 %v579
  %v603 = vunpack.c.l.b16 %v580
  %v604 = vunpack.c.l.b16 %v581
  %v605 = vunpack.c.l.b16 %v582
  %v606 = vunpack.c.l.b16 %v583
  %v607 = vunpack.c.l.b16 %v584
  %v608 = vpack.c.b16 %v601, %v600
  %v609 = vpack.c.b16 %v603, %v602
  %v610 = vpack.c.b16 %v605, %v604
  %v611 = vpack.c.b16 %v607, %v606
  %v617 = vsel %vm395, %v576, 0
  %619 = vmatprep.subr.bf16.mxu0 0
  %620 = vmatpush1.bf16.msra.mxu0 %v608
  %621 = vmatprep.subr.bf16.mxu0 0
  %622 = vmatpush1.bf16.msra.mxu0 %v609
  %623 = vmatprep.subr.bf16.mxu0 0
  %624 = vmatpush1.bf16.msra.mxu0 %v610
  %625 = vmatprep.subr.bf16.mxu0 0
  %626 = vmatpush1.bf16.msra.mxu0 %v611
  %627 = vmatprep.subr.bf16.mxu0 0
  %628 = vmatpush1.bf16.msra.mxu0 0
  %629 = vmatprep.subr.bf16.mxu0 0
  %630 = vmatpush1.bf16.msra.mxu0 0
  %631 = vmatprep.subr.bf16.mxu0 0
  %632 = vmatpush1.bf16.msra.mxu0 0
  %633 = vmatprep.subr.bf16.mxu0 0
  %634 = vmatpush1.bf16.msra.mxu0 0
  %635 = vmatprep.subr.bf16.mxu0 0
  %636 = vmatpush1.bf16.msra.mxu0 0
  %637 = vmatprep.subr.bf16.mxu0 0
  %638 = vmatpush1.bf16.msra.mxu0 0
  %639 = vmatprep.subr.bf16.mxu0 0
  %640 = vmatpush1.bf16.msra.mxu0 0
  %641 = vmatprep.subr.bf16.mxu0 0
  %642 = vmatpush1.bf16.msra.mxu0 0
  %643 = vmatprep.subr.bf16.mxu0 0
  %644 = vmatpush1.bf16.msra.mxu0 0
  %645 = vmatprep.subr.bf16.mxu0 0
  %646 = vmatpush1.bf16.msra.mxu0 0
  %647 = vmatprep.subr.bf16.mxu0 0
  %648 = vmatpush1.bf16.msra.mxu0 0
  %649 = vmatprep.subr.bf16.mxu0 0
  %650 = vmatpush1.bf16.msra.mxu0 0
  %651 = vmatprep.mubr.bf16.mxu0 0
  %652 = vmatmul.mubr.bf16.gmra.mrb[0].mxu0 %v617
  %v653 = vpop.f32.mrb[0].mxu0
  %v654 = vadd.f32 %v590, %v653
  %v655 = vpop.f32.mrb[0].mxu0
  %v656 = vpop.f32.mrb[0].mxu0
  %v657 = vadd.f32 %v590, %v656
  %v658 = vpop.f32.mrb[0].mxu0
  %659 = vdwg.mxu0
  %v660 = vmax.f32 %v654, 0.0
  %v661 = vmax.f32 %v657, 0.0
  %v662 = vpack.c.bf16 %v661, %v660
  %v663 = vld [vmem:[%s12] sm:$0xff]
  %v664 = vld [vmem:[%s12 + $0x8] sm:$0xff]
  %v665 = vld [vmem:[%s12 + $0x10] sm:$0xff]
  %v666 = vld [vmem:[%s12 + $0x18] sm:$0xff]
  %v667 = vld [vmem:[%s12 + $0x20] sm:$0xff]
  %v668 = vld [vmem:[%s12 + $0x28] sm:$0xff]
  %v669 = vld [vmem:[%s12 + $0x30] sm:$0xff]
  %v670 = vld [vmem:[%s12 + $0x38] sm:$0xff]
  %v671 = vld [vmem:[%s12 + $0x40] sm:$0xff]
  %v672 = vld [vmem:[%s12 + $0x48] sm:$0xff]
  %v673 = vld [vmem:[%s12 + $0x50] sm:$0xff]
  %v674 = vld [vmem:[%s12 + $0x58] sm:$0xff]
  %v675 = vld [vmem:[%s12 + $0x60] sm:$0xff]
  %v676 = vld [vmem:[%s12 + $0x68] sm:$0xff]
  %v677 = vld [vmem:[%s12 + $0x70] sm:$0xff]
  %v678 = vld [vmem:[%s12 + $0x78] sm:$0xff]
  %v679 = vld [vmem:[%s13] sm:$0x3]
  %v681 = vlaneseq
  %v682 = vshrl.u32 %v681, 7
  %v683 = vsub.s32 0, %v682
  %v684 = vrot.slane %v679, %v683
  %v685 = vlaneseq
  %v686 = vshrl.u32 %v685, 7
  %v687 = vsub.s32 1, %v686
  %v688 = vrot.slane %v679, %v687
  %v707 = vunpack.c.l.b16 %v663
  %v708 = vunpack.c.h.b16 %v663
  %v709 = vunpack.c.l.b16 %v664
  %v710 = vunpack.c.h.b16 %v664
  %v711 = vunpack.c.l.b16 %v665
  %v712 = vunpack.c.h.b16 %v665
  %v713 = vunpack.c.l.b16 %v666
  %v714 = vunpack.c.h.b16 %v666
  %v715 = vunpack.c.l.b16 %v667
  %v716 = vunpack.c.h.b16 %v667
  %v717 = vunpack.c.l.b16 %v668
  %v718 = vunpack.c.h.b16 %v668
  %v719 = vunpack.c.l.b16 %v669
  %v720 = vunpack.c.h.b16 %v669
  %v721 = vunpack.c.l.b16 %v670
  %v722 = vunpack.c.h.b16 %v670
  %v723 = vunpack.c.l.b16 %v671
  %v724 = vunpack.c.h.b16 %v671
  %v725 = vunpack.c.l.b16 %v672
  %v726 = vunpack.c.h.b16 %v672
  %v727 = vunpack.c.l.b16 %v673
  %v728 = vunpack.c.h.b16 %v673
  %v729 = vunpack.c.l.b16 %v674
  %v730 = vunpack.c.h.b16 %v674
  %v731 = vunpack.c.l.b16 %v675
  %v732 = vunpack.c.h.b16 %v675
  %v733 = vunpack.c.l.b16 %v676
  %v734 = vunpack.c.h.b16 %v676
  %v735 = vunpack.c.l.b16 %v677
  %v736 = vunpack.c.h.b16 %v677
  %v737 = vunpack.c.l.b16 %v678
  %v738 = vunpack.c.h.b16 %v678
  %v739 = vpack.c.b16 %v709, %v707
  %v740 = vpack.c.b16 %v710, %v708
  %v741 = vpack.c.b16 %v713, %v711
  %v742 = vpack.c.b16 %v714, %v712
  %v743 = vpack.c.b16 %v717, %v715
  %v744 = vpack.c.b16 %v718, %v716
  %v745 = vpack.c.b16 %v721, %v719
  %v746 = vpack.c.b16 %v722, %v720
  %v747 = vpack.c.b16 %v725, %v723
  %v748 = vpack.c.b16 %v726, %v724
  %v749 = vpack.c.b16 %v729, %v727
  %v750 = vpack.c.b16 %v730, %v728
  %v751 = vpack.c.b16 %v733, %v731
  %v752 = vpack.c.b16 %v734, %v732
  %v753 = vpack.c.b16 %v737, %v735
  %v754 = vpack.c.b16 %v738, %v736
  %771 = vmatprep.subr.bf16.mxu0 %v740
  %772 = vmatpush1.bf16.msra.mxu0 %v739
  %773 = vmatprep.subr.bf16.mxu0 %v742
  %774 = vmatpush1.bf16.msra.mxu0 %v741
  %775 = vmatprep.subr.bf16.mxu0 %v744
  %776 = vmatpush1.bf16.msra.mxu0 %v743
  %777 = vmatprep.subr.bf16.mxu0 %v746
  %778 = vmatpush1.bf16.msra.mxu0 %v745
  %779 = vmatprep.subr.bf16.mxu0 %v748
  %780 = vmatpush1.bf16.msra.mxu0 %v747
  %781 = vmatprep.subr.bf16.mxu0 %v750
  %782 = vmatpush1.bf16.msra.mxu0 %v749
  %783 = vmatprep.subr.bf16.mxu0 %v752
  %784 = vmatpush1.bf16.msra.mxu0 %v751
  %785 = vmatprep.subr.bf16.mxu0 %v754
  %786 = vmatpush1.bf16.msra.mxu0 %v753
  %787 = vmatprep.subr.bf16.mxu0 0
  %788 = vmatpush1.bf16.msra.mxu0 0
  %789 = vmatprep.subr.bf16.mxu0 0
  %790 = vmatpush1.bf16.msra.mxu0 0
  %791 = vmatprep.subr.bf16.mxu0 0
  %792 = vmatpush1.bf16.msra.mxu0 0
  %793 = vmatprep.subr.bf16.mxu0 0
  %794 = vmatpush1.bf16.msra.mxu0 0
  %795 = vmatprep.subr.bf16.mxu0 0
  %796 = vmatpush1.bf16.msra.mxu0 0
  %797 = vmatprep.subr.bf16.mxu0 0
  %798 = vmatpush1.bf16.msra.mxu0 0
  %799 = vmatprep.subr.bf16.mxu0 0
  %800 = vmatpush1.bf16.msra.mxu0 0
  %801 = vmatprep.subr.bf16.mxu0 0
  %802 = vmatpush1.bf16.msra.mxu0 0
  %803 = vmatprep.mubr.bf16.mxu0 0
  %804 = vmatmul.mubr.bf16.gmra.mrb[0].mxu0 %v662
  %v805 = vpop.f32.mrb[0].mxu0
  %v806 = vadd.f32 %v684, %v805
  %v807 = vpop.f32.mrb[0].mxu0
  %v808 = vadd.f32 %v688, %v807
  %v809 = vpop.f32.mrb[0].mxu0
  %v810 = vadd.f32 %v684, %v809
  %v811 = vpop.f32.mrb[0].mxu0
  %v812 = vadd.f32 %v688, %v811
  %813 = vdwg.mxu0
  %v814 = vpack.c.bf16 %v810, %v806
  %v815 = vpack.c.bf16 %v812, %v808
  %v818 = vunpack.c.l.b16 %v814
  %v819 = vunpack.c.l.b16 %v815
  %v820 = vunpack.c.h.b16 %v814
  %v821 = vunpack.c.h.b16 %v815
  %v822 = vpack.c.b16 %v819, %v818
  %v823 = vpack.c.b16 %v821, %v820
  %826 = vst [vmem:[%s14] sm:$0xff] %v822
  %827 = vst [vmem:[%s14 + $0x8] sm:$0xff] %v823
  // Predicated region
  $region58: #{cvae_forward.1} parent=0 // pred_check
    _
  $region59: #{cvae_forward.1} parent=0 // pred_check_branch
    %829 = sbr.rel (0) target = $region61
  $region60: #{cvae_forward.1} parent=0 // pred_region
    _
  $region61: #{cvae_forward.1} parent=0 // pred_fallthru
    _
  // Predicated region
  $region62: #{cvae_forward.1} parent=0 // pred_check
    _
  $region63: #{cvae_forward.1} parent=0 // pred_check_branch
    %831 = sbr.rel (0) target = $region65
  $region64: #{cvae_forward.1} parent=0 // pred_region
    _
  $region65: #{cvae_forward.1} parent=0 // pred_fallthru
    _
  // Predicated region
  $region66: #{cvae_forward.1} parent=0 // pred_check
    _
  $region67: #{cvae_forward.1} parent=0 // pred_check_branch
    %833 = sbr.rel (0) target = $region69
  $region68: #{cvae_forward.1} parent=0 // pred_region
    _
  $region69: #{cvae_forward.1} parent=0 // pred_fallthru
    _
  // Predicated region
  $region70: #{cvae_forward.1} parent=0 // pred_check
    _
  $region71: #{cvae_forward.1} parent=0 // pred_check_branch
    %835 = sbr.rel (0) target = $region73
  $region72: #{cvae_forward.1} parent=0 // pred_region
    _
  $region73: #{cvae_forward.1} parent=0 // pred_fallthru
    _

</llo_original>
